<compile_context>
chip_gen: v5e
topology: v5e:2x2
jax: 0.10.0
libtpu: 0.0.40
codegen_flags: <defaults>
</compile_context>

<pallas_src>
import jax
import jax.numpy as jnp
from jax.experimental import pallas as pl
from jax.experimental.pallas import tpu as pltpu


def dot_attention_kernel(ann_ref, h_ref, ctx_ref, att_ref):
    # ann_ref : (BB, L, D), h_ref : (BB, D) -> ctx_ref : (BB, D), att_ref : (BB, L)
    ann = ann_ref[...]                       # keep native dtype (bf16 stays packed)
    h = h_ref[...]                           # (BB, D)

    # energy[b, l] = <annotations[b, l, :], h[b, :]>
    # multiply in the input dtype, accumulate the lane reduction in f32 (VPU only).
    energy = jnp.sum(ann * h[:, None, :], axis=-1, dtype=jnp.float32)   # (BB, L)

    # numerically stable softmax along the lane axis, statistics in f32
    m = jnp.max(energy, axis=-1, keepdims=True)        # (BB, 1)
    p = jnp.exp(energy - m)                            # (BB, L)
    denom = jnp.sum(p, axis=-1, keepdims=True)         # (BB, 1)
    # exact division: rows sum to 1 up to f32 rounding (approx reciprocal removed)
    att_f32 = p / denom                                # (BB, L)

    # context[b, d] = sum_l att[b, l] * annotations[b, l, d]
    # multiply in the input dtype, accumulate over L in f32 (no MXU, no att transpose)
    att_in = att_f32.astype(ann.dtype)
    ctx = jnp.sum(att_in[:, :, None] * ann, axis=1, dtype=jnp.float32)  # (BB, D)

    ctx_ref[...] = ctx.astype(ctx_ref.dtype)
    att_ref[...] = att_f32.astype(att_ref.dtype)


def concat_hidden_states(hn):
    # (layers, B, H) -> (B, layers*H)
    return jnp.transpose(hn, (1, 0, 2)).reshape(hn.shape[1], -1)


def _vmem_budgets():
    # Generation-aware budgets: v7x has 64 MiB VMEM per TensorCore, v5e/v6e have 128 MiB.
    try:
        cap = pltpu.get_tpu_info().vmem_capacity_bytes
    except Exception:
        cap = 64 * 1024 * 1024                       # conservative fallback
    if cap <= 64 * 1024 * 1024:                      # v7x-class part
        return 24 * 1024 * 1024, 44 * 1024 * 1024    # (tile budget, vmem_limit_bytes)
    return 56 * 1024 * 1024, 96 * 1024 * 1024        # v5e / v6e


def _choose_batch_block(B, L, D, itemsize, tile_budget, min_blocks=4):
    # Per batch row resident in VMEM:
    #   double-buffered I/O blocks (ann L*D + h D inputs, ctx D + att L outputs) at the
    #   input itemsize, plus ~3 full-row f32 temporaries (ann*h product, widened
    #   reduction, att*ann product).
    per_b = (L * D + 2 * D + L) * itemsize * 2 + 3 * L * D * 4
    bb_vmem = max(8, tile_budget // max(per_b, 1))
    # Keep at least `min_blocks` grid steps so the v7x dual-core 'parallel' sharding has
    # work and block i+1 prefetch overlaps compute of block i (also helps v5e/v6e).
    bb_grid = max(8, pl.cdiv(B, min_blocks))
    bb = max(8, (min(bb_vmem, bb_grid) // 8) * 8)    # sublane-dense multiple of 8
    if bb >= B:
        return B                                     # full-batch block == full array dim
    return bb


class DotAttentionPallas:
    def __init__(self, hidden_size, num_layers, bidirectional, max_length, batch_size):
        self.hidden_size = hidden_size
        self.num_layers = num_layers
        self.bi_factor = 2 if bidirectional else 1
        self.max_length = max_length
        self.batch_size = batch_size
        # DotAttention has no learned parameters (energy_input_dim is unused in forward).

    def __call__(self, hidden, annotations):
        B, L, D = annotations.shape
        # glue: select last bi_factor layers and concatenate (plain JAX)
        h_cat = concat_hidden_states(hidden[-self.bi_factor:])   # (B, D)
        assert h_cat.shape == (B, D)

        tile_budget, vmem_limit = _vmem_budgets()
        itemsize = jnp.dtype(annotations.dtype).itemsize
        BB = _choose_batch_block(B, L, D, itemsize, tile_budget)
        grid = (pl.cdiv(B, BB),)

        # No jnp.pad: if B % BB != 0 the last block is partial; out-of-range input rows
        # contain undefined data but every reduction in the kernel is per-row, and Pallas
        # masks the out-of-range output writes.
        # TODO(synk): for very large L*D (a single BB=8 block exceeding the VMEM budget)
        # add an inner L grid axis with an online-softmax accumulator instead of relying
        # on a single huge block.

        context, attention = pl.pallas_call(
            dot_attention_kernel,
            out_shape=(
                jax.ShapeDtypeStruct((B, D), annotations.dtype),
                jax.ShapeDtypeStruct((B, L), annotations.dtype),
            ),
            grid_spec=pltpu.PrefetchScalarGridSpec(
                num_scalar_prefetch=0,
                grid=grid,
                in_specs=[
                    pl.BlockSpec((BB, L, D), lambda b: (b, 0, 0)),
                    pl.BlockSpec((BB, D), lambda b: (b, 0)),
                ],
                out_specs=[
                    pl.BlockSpec((BB, D), lambda b: (b, 0)),
                    pl.BlockSpec((BB, L), lambda b: (b, 0)),
                ],
            ),
            compiler_params=pltpu.CompilerParams(
                dimension_semantics=("parallel",),
                vmem_limit_bytes=vmem_limit,
            ),
        )(annotations, h_cat)

        # match PyTorch output shapes: context (B, 1, D), attention (B, L, 1)
        return context.reshape(B, 1, D), attention.reshape(B, L, 1)


def reference_forward(hidden, annotations, bi_factor):
    h_cat = concat_hidden_states(hidden[-bi_factor:])                     # (B, D)
    energy = jnp.einsum("bld,bd->bl", annotations, h_cat,
                        precision=jax.lax.Precision.HIGHEST)[..., None]   # (B, L, 1)
    attention = jax.nn.softmax(energy, axis=1)
    context = jnp.einsum("blx,bld->bxd", attention, annotations,
                         precision=jax.lax.Precision.HIGHEST)             # (B, 1, D)
    return context, attention


if __name__ == "__main__":
    # small shapes consistent with the module
    hidden_size = 32
    num_layers = 2
    bidirectional = True
    bi_factor = 2 if bidirectional else 1
    max_length = 8
    batch_size = 2
    D = bi_factor * hidden_size

    key = jax.random.PRNGKey(0)
    k1, k2 = jax.random.split(key)
    hidden = jax.random.normal(
        k1, (num_layers * bi_factor, batch_size, hidden_size), dtype=jnp.float32)
    annotations = jax.random.normal(
        k2, (batch_size, max_length, D), dtype=jnp.float32)

    mod = DotAttentionPallas(hidden_size, num_layers, bidirectional,
                             max_length, batch_size)
    context, attention = mod(hidden, annotations)
    jax.block_until_ready((context, attention))

    ctx_ref, att_ref = reference_forward(hidden, annotations, bi_factor)
    assert context.shape == (batch_size, 1, D)
    assert attention.shape == (batch_size, max_length, 1)
    assert jnp.allclose(context, ctx_ref, atol=1e-4, rtol=1e-4)
    assert jnp.allclose(attention, att_ref, atol=1e-4, rtol=1e-4)
    # attention rows must sum to ~1 (exact softmax normalization in the kernel)
    assert jnp.allclose(jnp.sum(attention, axis=1), 1.0, atol=1e-5)

    print("KERNEL_OK")
</pallas_src>

<mosaic_0001>
module attributes {stable_mosaic.version = 11 : i64} {
  func.func @dot_attention_kernel(%arg0: i32, %arg1: memref<2x8x64xf32, #tpu.memory_space<vmem>>, %arg2: memref<2x64xf32, #tpu.memory_space<vmem>>, %arg3: memref<2x64xf32, #tpu.memory_space<vmem>>, %arg4: memref<2x8xf32, #tpu.memory_space<vmem>>) attributes {dimension_semantics = [#tpu.dimension_semantics<parallel>], iteration_bounds = array<i64: 1>, scalar_prefetch = 0 : i64, scratch_operands = 0 : i64, tpu.core_type = #tpu.core_type<tc>, window_params = [{transform_indices = @transform_0, window_bounds = array<i64: 2, 8, 64>}, {transform_indices = @transform_1, window_bounds = array<i64: 2, 64>}, {transform_indices = @transform_2, window_bounds = array<i64: 2, 64>}, {transform_indices = @transform_3, window_bounds = array<i64: 2, 8>}]} {
    %c0 = arith.constant 0 : index
    %c0_0 = arith.constant 0 : index
    %c0_1 = arith.constant 0 : index
    %0 = vector.load %arg1[%c0, %c0_0, %c0_1] : memref<2x8x64xf32, #tpu.memory_space<vmem>>, vector<2x8x64xf32>
    %c0_2 = arith.constant 0 : index
    %c0_3 = arith.constant 0 : index
    %1 = vector.load %arg2[%c0_2, %c0_3] : memref<2x64xf32, #tpu.memory_space<vmem>>, vector<2x64xf32>
    %2 = vector.shape_cast %1 : vector<2x64xf32> to vector<2x1x64xf32>
    %3 = vector.broadcast %2 : vector<2x1x64xf32> to vector<2x8x64xf32>
    %4 = arith.mulf %0, %3 : vector<2x8x64xf32>
    %cst = arith.constant dense<0.000000e+00> : vector<2x8xf32>
    %5 = vector.multi_reduction <add>, %4, %cst [2] : vector<2x8x64xf32> to vector<2x8xf32>
    %cst_4 = arith.constant dense<0xFF800000> : vector<2xf32>
    %6 = vector.multi_reduction <maximumf>, %5, %cst_4 [1] : vector<2x8xf32> to vector<2xf32>
    %7 = vector.shape_cast %6 : vector<2xf32> to vector<2x1xf32>
    %8 = vector.broadcast %7 : vector<2x1xf32> to vector<2x8xf32>
    %9 = arith.subf %5, %8 : vector<2x8xf32>
    %10 = math.exp %9 : vector<2x8xf32>
    %cst_5 = arith.constant dense<0.000000e+00> : vector<2xf32>
    %11 = vector.multi_reduction <add>, %10, %cst_5 [1] : vector<2x8xf32> to vector<2xf32>
    %12 = vector.shape_cast %11 : vector<2xf32> to vector<2x1xf32>
    %13 = vector.broadcast %12 : vector<2x1xf32> to vector<2x8xf32>
    %14 = arith.divf %10, %13 : vector<2x8xf32>
    %15 = vector.shape_cast %14 : vector<2x8xf32> to vector<2x8x1xf32>
    %16 = vector.broadcast %15 : vector<2x8x1xf32> to vector<2x8x64xf32>
    %17 = arith.mulf %16, %0 : vector<2x8x64xf32>
    %cst_6 = arith.constant dense<0.000000e+00> : vector<2x64xf32>
    %18 = vector.multi_reduction <add>, %17, %cst_6 [1] : vector<2x8x64xf32> to vector<2x64xf32>
    %c0_7 = arith.constant 0 : index
    %c0_8 = arith.constant 0 : index
    %19 = vector.load %arg3[%c0_7, %c0_8] : memref<2x64xf32, #tpu.memory_space<vmem>>, vector<2x64xf32>
    tpu.vector_store %arg3[%c0_7, %c0_8], %18 {strides = array<i32>} : memref<2x64xf32, #tpu.memory_space<vmem>>, vector<2x64xf32>,
    %c0_9 = arith.constant 0 : index
    %c0_10 = arith.constant 0 : index
    %20 = vector.load %arg4[%c0_9, %c0_10] : memref<2x8xf32, #tpu.memory_space<vmem>>, vector<2x8xf32>
    tpu.vector_store %arg4[%c0_9, %c0_10], %14 {strides = array<i32>} : memref<2x8xf32, #tpu.memory_space<vmem>>, vector<2x8xf32>,
    return
  }
  func.func @transform_0(%arg0: i32) -> (i32, i32, i32) {
    %c0_i32 = arith.constant 0 : i32
    %c0_i32_0 = arith.constant 0 : i32
    %c0_i32_1 = arith.constant 0 : i32
    return %arg0, %c0_i32, %c0_i32_0 : i32, i32, i32
  }
  func.func @transform_1(%arg0: i32) -> (i32, i32) {
    %c0_i32 = arith.constant 0 : i32
    %c0_i32_0 = arith.constant 0 : i32
    return %arg0, %c0_i32 : i32, i32
  }
  func.func @transform_2(%arg0: i32) -> (i32, i32) {
    %c0_i32 = arith.constant 0 : i32
    %c0_i32_0 = arith.constant 0 : i32
    return %arg0, %c0_i32 : i32, i32
  }
  func.func @transform_3(%arg0: i32) -> (i32, i32) {
    %c0_i32 = arith.constant 0 : i32
    %c0_i32_0 = arith.constant 0 : i32
    return %arg0, %c0_i32 : i32, i32
  }
}

</mosaic_0001>

<llo_original>
// kernel: tpu_custom_call.1
$region0: #{tpu_custom_call.1}
  #allocation0 [shape = 'u32[]', space=smem, size = 0x4, offset = 0x4, fixed_abs, tag = 'smem constant byte address 0x4 - core index']
  #allocation1 [shape = 'u32[72,128]{1,0:T(1,128)}', space=vmem, size = 0x9000, scoped, tag = 'internal scratch']
  %s0 = inlined_call_operand.hbm [shape: f32[2,8,64], index: 0, kind: input, shape index: {}]
  %s1 = inlined_call_operand.hbm [shape: f32[2,64], index: 1, kind: input, shape index: {}]
  %s2 = inlined_call_operand.hbm [shape: f32[2,64], index: 2, kind: output, shape index: {0}]
  %s3 = inlined_call_operand.hbm [shape: f32[2,8], index: 3, kind: output, shape index: {1}]
  %4 = xla_tuple %s2, %s3
  %s5 = sld [smem:[#allocation0]]
  $region34: #{tpu_custom_call.1} parent=0
    _
  %s7 = ssub.s32 1, %s5
  %s8 = scalar_select 0, %s7, %s5
  $region1: #{tpu_custom_call.1} parent=0
    #allocation2 [shape = 'u8[8192]{0}', space=vmem, size = 0x2000, scoped, tag = 'input window, operand 0, single buffered']
    #allocation3 [shape = 's32[1]{0}', space=sflag, size = 0x4, scoped, tag = 'scoped memory for tpu_custom_call.1']
    #allocation4 [shape = 's32[1]{0}', space=sflag, size = 0x4, scoped, tag = 'scoped memory for tpu_custom_call.1']
    #allocation5 [shape = 'u8[1024]{0}', space=vmem, size = 0x400, scoped, tag = 'input window, operand 1, single buffered']
    #allocation6 [shape = 's32[1]{0}', space=sflag, size = 0x4, scoped, tag = 'scoped memory for tpu_custom_call.1']
    #allocation7 [shape = 'u8[1024]{0}', space=vmem, size = 0x400, scoped, tag = 'output window, operand 0, single buffered']
    #allocation8 [shape = 'u8[1024]{0}', space=vmem, size = 0x400, scoped, tag = 'output window, operand 1, single buffered']
    #allocation9 [shape = 's32[1]{0}', space=sflag, size = 0x4, scoped, tag = 'scoped memory for tpu_custom_call.1']
    %9 = vsyncpa [#allocation3], 0
    %10 = vsyncpa [#allocation6], 0
    %11 = vsyncpa [#allocation4], 0
    %12 = vsyncpa [#allocation9], 0
    // Predicated region
    $region2: #{tpu_custom_call.1} parent=1 // pred_check
      _
    $region3: #{tpu_custom_call.1} parent=1 // pred_check_branch
      %14 = sbr.rel (0) target = $region5
    $region4: #{tpu_custom_call.1} parent=1 // pred_region
      %16 = vsyncadd [#allocation3], 0
      %s17 = sshll.u32 %s0, 4
      %s18 = int_to_ptr.hbm [resolvable:$true] %s17
      %s19 = sshll.u32 [#allocation2], 4
      %s20 = int_to_ptr.vmem [resolvable:$true] %s19
      %25 = dma.hbm_to_vmem [thread:$0]  %s18, 256, %s20, [#allocation3], 128, 128, 8
    $region5: #{tpu_custom_call.1} parent=1 // pred_fallthru
      _
    // Predicated region
    $region6: #{tpu_custom_call.1} parent=1 // pred_check
      _
    $region7: #{tpu_custom_call.1} parent=1 // pred_check_branch
      %27 = sbr.rel (0) target = $region9
    $region8: #{tpu_custom_call.1} parent=1 // pred_region
      %29 = vsyncadd [#allocation6], 0
      %s31 = sshll.u32 %s1, 4
      %s32 = int_to_ptr.hbm [resolvable:$true] %s31
      %s33 = sshll.u32 [#allocation5], 4
      %s34 = int_to_ptr.vmem [resolvable:$true] %s33
      %36 = dma.hbm_to_vmem [thread:$0]  %s32, 32, %s34, [#allocation6]
    $region9: #{tpu_custom_call.1} parent=1 // pred_fallthru
      _
    // Predicated region
    $region10: #{tpu_custom_call.1} parent=1 // pred_check
      _
    $region11: #{tpu_custom_call.1} parent=1 // pred_check_branch
      %38 = sbr.rel (0) target = $region13
    $region12: #{tpu_custom_call.1} parent=1 // pred_region
      %40 = dma.done [#allocation3], 256
    $region13: #{tpu_custom_call.1} parent=1 // pred_fallthru
      _
    // Predicated region
    $region14: #{tpu_custom_call.1} parent=1 // pred_check
      _
    $region15: #{tpu_custom_call.1} parent=1 // pred_check_branch
      %42 = sbr.rel (0) target = $region17
    $region16: #{tpu_custom_call.1} parent=1 // pred_region
      %44 = dma.done [#allocation6], 32
    $region17: #{tpu_custom_call.1} parent=1 // pred_fallthru
      _
    %v45 = vld [vmem:[#allocation2] sm:$0xff]
    %v46 = vld [vmem:[#allocation2 + $0x8] sm:$0xff]
    %v47 = vld [vmem:[#allocation5] sm:$0x3]
    %v49 = vrot.slane %v47, 1
    %v50 = vperm.slane %v47, 0
    %v51 = vperm.slane %v49, 0
    %v54 = vmul.f32 %v45, %v50
    %v55 = vmul.f32 %v46, %v51
    %vm56 = vcmask 523264
    %v57 = vsel %vm56, %v54, 0.0
    %58 = vadd.xlane.f32.xlu0 %v57
    %v59 = vpop.xlane.xlu0 %58
    %v60 = vsel %vm56, %v55, 0.0
    %61 = vadd.xlane.f32.xlu0 %v60
    %v62 = vpop.xlane.xlu0 %61
    %v65 = vlaneseq
    %v66 = vand.u32 %v65, 127
    %v67 = vperm.slane %v59, %v66
    %v68 = vperm.slane %v62, %v66
    %vm69 = vcmask 1041409
    %v70 = vsel %vm69, %v68, %v67
    %vm72 = vcmask 58368
    %v73 = vsel %vm72, %v70, -inf
    %74 = vmax.xlane.f32.xlu0 %v73
    %v75 = vpop.xlane.xlu0 %74
    %v77 = vperm.slane %v75, 0
    %v78 = vperm.slane %v75, 1
    %v81 = vsub.f32 %v59, %v77
    %v82 = vsub.f32 %v62, %v78
    %v83 = vmul.f32 %v81, 1.442695
    %v84 = vpow.pop %v83
    %v85 = vmul.f32 %v82, 1.442695
    %v86 = vpow.pop %v85
    %89 = vset.pattern.permute.xlu0 0
    %90 = vperm.xlu0 %89, %v84
    %v91 = vpop.permute.xlu0 %90
    %92 = vset.pattern.permute.xlu0 0
    %93 = vperm.xlu0 %92, %v86
    %v94 = vpop.permute.xlu0 %93
    %v95 = vperm.slane %v91, %v66
    %v96 = vperm.slane %v94, %v66
    %v97 = vsel %vm69, %v96, %v95
    %v99 = vsel %vm72, %v97, 0.0
    %100 = vadd.xlane.f32.xlu0 %v99
    %v101 = vpop.xlane.xlu0 %100
    %v103 = vperm.slane %v101, 0
    %v104 = vperm.slane %v101, 1
    %v107 = vrcp.pop %v103
    %v108 = vmul.f32 %v103, %v107
    %v109 = vsub.f32 1.0, %v108
    %v110 = vmul.f32 %v107, %v109
    %v111 = vadd.f32 %v107, %v110
    %vm112 = vweird.f32 %v103
    %vm113 = vweird.f32 %v107
    %vm114 = vmor %vm112, %vm113
    %v115 = vsel %vm114, %v107, %v111
    %v116 = vand.u32 2147483647, %v103
    %vm117 = vcmp.eq.f32.partialorder %v116, 8.507059e+37
    %v118 = vand.u32 %v103, 2147483648
    %v119 = vor.u32 1.1754944e-38, %v118
    %v120 = vsel %vm117, %v119, %v115
    %v121 = vmul.f32 %v84, %v120
    %v122 = vrcp.pop %v104
    %v123 = vmul.f32 %v104, %v122
    %v124 = vsub.f32 1.0, %v123
    %v125 = vmul.f32 %v122, %v124
    %v126 = vadd.f32 %v122, %v125
    %vm127 = vweird.f32 %v104
    %vm128 = vweird.f32 %v122
    %vm129 = vmor %vm127, %vm128
    %v130 = vsel %vm129, %v122, %v126
    %v131 = vand.u32 2147483647, %v104
    %vm132 = vcmp.eq.f32.partialorder %v131, 8.507059e+37
    %v133 = vand.u32 %v104, 2147483648
    %v134 = vor.u32 1.1754944e-38, %v133
    %v135 = vsel %vm132, %v134, %v130
    %v136 = vmul.f32 %v86, %v135
    %138 = vset.pattern.permute.xlu0 0
    %139 = vperm.xlu0 %138, %v121
    %v140 = vpop.permute.xlu0 %139
    %143 = vset.pattern.permute.xlu0 0
    %144 = vperm.xlu0 %143, %v136
    %v145 = vpop.permute.xlu0 %144
    %v147 = vmul.f32 %v140, %v45
    %v148 = vmul.f32 %v145, %v46
    %v149 = vsel %vm56, %v147, 0.0
    %v150 = vrot.slane %v149, 4
    %v151 = vadd.f32 %v149, %v150
    %v152 = vrot.slane %v151, 2
    %v153 = vadd.f32 %v151, %v152
    %v154 = vrot.slane %v153, 1
    %v155 = vadd.f32 %v153, %v154
    %v156 = vsel %vm56, %v148, 0.0
    %v157 = vrot.slane %v156, 4
    %v158 = vadd.f32 %v156, %v157
    %v159 = vrot.slane %v158, 2
    %v160 = vadd.f32 %v158, %v159
    %v161 = vrot.slane %v160, 1
    %v162 = vadd.f32 %v160, %v161
    %v165 = vsel %vm69, %v162, %v155
    %vm167 = vcmask 517120
    %168 = vst.msk [vmem:[#allocation7] sm:$0x3] %vm167, %v165
    %v169 = vperm.slane %v140, %v66
    %v170 = vperm.slane %v145, %v66
    %v171 = vsel %vm69, %v170, %v169
    %173 = vst.msk [vmem:[#allocation8] sm:$0x3] %vm72, %v171
    // Predicated region
    $region18: #{tpu_custom_call.1} parent=1 // pred_check
      _
    $region19: #{tpu_custom_call.1} parent=1 // pred_check_branch
      %175 = sbr.rel (0) target = $region21
    $region20: #{tpu_custom_call.1} parent=1 // pred_region
      %177 = vsyncadd [#allocation4], 0
      %s179 = sshll.u32 [#allocation7], 4
      %s180 = int_to_ptr.vmem [resolvable:$true] %s179
      %s181 = sshll.u32 %s2, 4
      %s182 = int_to_ptr.hbm [resolvable:$true] %s181
      %184 = dma.vmem_to_hbm [thread:$0]  %s180, 32, %s182, [#allocation4]
    $region21: #{tpu_custom_call.1} parent=1 // pred_fallthru
      _
    // Predicated region
    $region22: #{tpu_custom_call.1} parent=1 // pred_check
      _
    $region23: #{tpu_custom_call.1} parent=1 // pred_check_branch
      %186 = sbr.rel (0) target = $region25
    $region24: #{tpu_custom_call.1} parent=1 // pred_region
      %188 = vsyncadd [#allocation9], 0
      %s190 = sshll.u32 [#allocation8], 4
      %s191 = int_to_ptr.vmem [resolvable:$true] %s190
      %s192 = sshll.u32 %s3, 4
      %s193 = int_to_ptr.hbm [resolvable:$true] %s192
      %195 = dma.vmem_to_hbm [thread:$0]  %s191, 32, %s193, [#allocation9]
    $region25: #{tpu_custom_call.1} parent=1 // pred_fallthru
      _
    // Predicated region
    $region26: #{tpu_custom_call.1} parent=1 // pred_check
      _
    $region27: #{tpu_custom_call.1} parent=1 // pred_check_branch
      %197 = sbr.rel (0) target = $region29
    $region28: #{tpu_custom_call.1} parent=1 // pred_region
      %199 = dma.done [#allocation4], 32
    $region29: #{tpu_custom_call.1} parent=1 // pred_fallthru
      _
    // Predicated region
    $region30: #{tpu_custom_call.1} parent=1 // pred_check
      _
    $region31: #{tpu_custom_call.1} parent=1 // pred_check_branch
      %201 = sbr.rel (0) target = $region33
    $region32: #{tpu_custom_call.1} parent=1 // pred_region
      %203 = dma.done [#allocation9], 32
    $region33: #{tpu_custom_call.1} parent=1 // pred_fallthru
      _
    %204 = vsyncpa [#allocation3], 1
    %205 = vsyncpa [#allocation6], 1
    %206 = vsyncpa [#allocation4], 1
    %207 = vsyncpa [#allocation9], 1

</llo_original>
